<compile_context>
chip_gen: v5e
topology: v5e:2x2
jax: 0.10.0
libtpu: 0.0.40
codegen_flags: <defaults>
</compile_context>

<pallas_src>
import functools

import jax
import jax.numpy as jnp
from jax.experimental import pallas as pl
from jax.experimental.pallas import tpu as pltpu


def _round_up(x: int, m: int) -> int:
    return (x + m - 1) // m * m


def _pick_row_tile(n: int, desired: int) -> int:
    """Row tile: multiple of 8, >= 2 row tiles when possible, divides N if it can."""
    cap = max(8, _round_up(-(-n // 2), 8))            # at least 2 row tiles (v7x)
    t = min(_round_up(desired, 8), cap, _round_up(n, 8))
    if n % 8 == 0:
        for cand in range(t, 7, -8):                  # prefer a divisor -> no N pad
            if n % cand == 0:
                return cand
    return t


def _pick_k_tile(i: int, desired: int) -> int:
    """K tile for the split path: multiple of 128, divides I if it can."""
    t = min(_round_up(desired, 128), _round_up(i, 128))
    if i % 128 == 0:
        for cand in range(t, 127, -128):              # prefer a divisor -> no K pad
            if i % cand == 0:
                return cand
    return t


def _layernorm_epilogue(x, b_ref, res_ref, g_ref, be_ref, o_ref, eps):
    # TODO(synk): dropout is identity here (eval mode); a training-mode mask
    # would be applied to the dense output `x` before the residual add.
    x = (x + b_ref[...].astype(jnp.float32) + res_ref[...].astype(jnp.float32))
    # One-pass moments over the hidden dim: var = E[x^2] - mu^2 (clamped >= 0).
    mu = jnp.mean(x, axis=-1, keepdims=True)
    var = jnp.maximum(jnp.mean(x * x, axis=-1, keepdims=True) - mu * mu, 0.0)
    xn = (x - mu) * jax.lax.rsqrt(var + eps)
    o_ref[...] = (xn * g_ref[...].astype(jnp.float32)
                  + be_ref[...].astype(jnp.float32)).astype(o_ref.dtype)


def _luke_output_kernel_resident(hs_ref, w_ref, b_ref, res_ref, g_ref, be_ref,
                                 o_ref, *, eps: float):
    # Full-K matmul on the MXU (bf16 operands, f32 accumulation), fused epilogue.
    x = jnp.dot(hs_ref[...], w_ref[...], preferred_element_type=jnp.float32)
    _layernorm_epilogue(x, b_ref, res_ref, g_ref, be_ref, o_ref, eps)


def _luke_output_kernel_split(hs_ref, w_ref, b_ref, res_ref, g_ref, be_ref,
                              o_ref, acc_ref, *, eps: float):
    k = pl.program_id(1)

    @pl.when(k == 0)
    def _():
        acc_ref[...] = jnp.zeros_like(acc_ref)

    acc_ref[...] += jnp.dot(hs_ref[...], w_ref[...],
                            preferred_element_type=jnp.float32)

    @pl.when(k == pl.num_programs(1) - 1)
    def _():
        _layernorm_epilogue(acc_ref[...], b_ref, res_ref, g_ref, be_ref,
                            o_ref, eps)


# VMEM budget for keeping W fully resident (double-buffered by Pallas).
_W_RESIDENT_BUDGET = 20 * 1024 * 1024


def luke_output_pallas(hidden_states, w_t, bias, input_tensor, gamma, beta, *,
                       eps: float = 1e-12, tile_n: int = 256,
                       tile_k: int | None = None,
                       matmul_dtype=jnp.bfloat16):
    """Fused dense + residual-add + LayerNorm (LukeOutput.forward, eval mode)."""
    N, I = hidden_states.shape
    H = input_tensor.shape[-1]
    out_dtype = input_tensor.dtype

    # bf16 matmul operands (MXU-native, half the HBM bytes); f32 accumulation.
    hidden_states = hidden_states.astype(matmul_dtype)
    w_t = w_t.astype(matmul_dtype)
    mm_item = jnp.dtype(matmul_dtype).itemsize
    res_item = jnp.dtype(input_tensor.dtype).itemsize
    out_item = jnp.dtype(out_dtype).itemsize

    tile_n = _pick_row_tile(N, tile_n)

    if tile_k is None:
        # Resident-W fast path when the whole weight fits the VMEM budget.
        resident = 2 * I * H * mm_item <= _W_RESIDENT_BUDGET
        tile_k = I if resident else _pick_k_tile(I, 512)
    else:
        tile_k = I if tile_k >= I else _pick_k_tile(I, tile_k)
    resident = tile_k == I

    # Pad only when unavoidable (tile choice above avoids it for typical shapes).
    n_pad = _round_up(N, tile_n)
    k_pad = _round_up(I, tile_k)
    if n_pad != N or k_pad != I:
        hidden_states = jnp.pad(hidden_states, ((0, n_pad - N), (0, k_pad - I)))
    if n_pad != N:
        input_tensor = jnp.pad(input_tensor, ((0, n_pad - N), (0, 0)))
    if k_pad != I:
        w_t = jnp.pad(w_t, ((0, k_pad - I), (0, 0)))

    bias = bias.reshape(1, H)
    gamma = gamma.reshape(1, H)
    beta = beta.reshape(1, H)

    # Rough VMEM footprint (double-buffered blocks + optional f32 accumulator),
    # capped at 48 MiB to leave headroom on v7x's 64 MiB physical VMEM.
    vmem_need = (2 * tile_n * tile_k * mm_item            # hidden_states block
                 + 2 * tile_k * H * mm_item               # w_t block
                 + 2 * tile_n * H * res_item              # residual block
                 + 2 * tile_n * H * out_item              # output block
                 + 6 * H * 4                              # bias/gamma/beta
                 + (0 if resident else tile_n * H * 4))   # accumulator
    vmem_limit = min(48 * 1024 * 1024, max(2 * vmem_need, 16 * 1024 * 1024))

    if resident:
        grid = (n_pad // tile_n,)
        kernel = functools.partial(_luke_output_kernel_resident, eps=eps)
        in_specs = [
            pl.BlockSpec((tile_n, k_pad), lambda i: (i, 0)),   # hidden_states
            pl.BlockSpec((k_pad, H), lambda i: (0, 0)),        # w_t (constant -> one DMA)
            pl.BlockSpec((1, H), lambda i: (0, 0)),            # bias
            pl.BlockSpec((tile_n, H), lambda i: (i, 0)),       # residual
            pl.BlockSpec((1, H), lambda i: (0, 0)),            # gamma
            pl.BlockSpec((1, H), lambda i: (0, 0)),            # beta
        ]
        out_specs = pl.BlockSpec((tile_n, H), lambda i: (i, 0))
        scratch_shapes = []
        dim_sem = ("parallel",)
    else:
        grid = (n_pad // tile_n, k_pad // tile_k)
        kernel = functools.partial(_luke_output_kernel_split, eps=eps)
        in_specs = [
            pl.BlockSpec((tile_n, tile_k), lambda i, k: (i, k)),   # hidden_states
            pl.BlockSpec((tile_k, H), lambda i, k: (k, 0)),        # w_t
            pl.BlockSpec((1, H), lambda i, k: (0, 0)),             # bias
            pl.BlockSpec((tile_n, H), lambda i, k: (i, 0)),        # residual
            pl.BlockSpec((1, H), lambda i, k: (0, 0)),             # gamma
            pl.BlockSpec((1, H), lambda i, k: (0, 0)),             # beta
        ]
        out_specs = pl.BlockSpec((tile_n, H), lambda i, k: (i, 0))
        scratch_shapes = [pltpu.VMEM((tile_n, H), jnp.float32)]
        dim_sem = ("parallel", "arbitrary")

    out = pl.pallas_call(
        kernel,
        out_shape=jax.ShapeDtypeStruct((n_pad, H), out_dtype),
        grid_spec=pltpu.PrefetchScalarGridSpec(
            num_scalar_prefetch=0,
            grid=grid,
            in_specs=in_specs,
            out_specs=out_specs,
            scratch_shapes=scratch_shapes,
        ),
        compiler_params=pltpu.CompilerParams(
            dimension_semantics=dim_sem,
            vmem_limit_bytes=int(vmem_limit),
        ),
    )(hidden_states, w_t, bias, input_tensor, gamma, beta)

    return out[:N]


def reference_forward(hidden_states, w_t, bias, input_tensor, gamma, beta, eps):
    x = jnp.dot(hidden_states, w_t,
                preferred_element_type=jnp.float32) + bias + input_tensor
    mu = jnp.mean(x, axis=-1, keepdims=True)
    var = jnp.mean((x - mu) ** 2, axis=-1, keepdims=True)
    return (x - mu) * jax.lax.rsqrt(var + eps) * gamma + beta


if __name__ == "__main__":
    # Small config consistent with LukeConfig semantics.
    hidden_size = 128          # H  (lane-dense output)
    intermediate_size = 512    # I
    layer_norm_eps = 1e-12
    batch, seq = 2, 8          # N = 16

    N = batch * seq
    key = jax.random.PRNGKey(0)
    ks = jax.random.split(key, 6)

    # Parameters (deterministic, synthetic). torch Linear weight is (H, I).
    dense_w = 0.02 * jax.random.normal(ks[0], (hidden_size, intermediate_size),
                                       jnp.float32)
    w_t = dense_w.T                                            # (I, H)
    dense_b = 0.02 * jax.random.normal(ks[1], (hidden_size,), jnp.float32)
    gamma = 1.0 + 0.1 * jax.random.normal(ks[2], (hidden_size,), jnp.float32)
    beta = 0.1 * jax.random.normal(ks[3], (hidden_size,), jnp.float32)

    # Inputs.
    hidden_states = jax.random.normal(ks[4], (N, intermediate_size), jnp.float32)
    input_tensor = jax.random.normal(ks[5], (N, hidden_size), jnp.float32)

    out = luke_output_pallas(
        hidden_states, w_t, dense_b, input_tensor, gamma, beta,
        eps=layer_norm_eps)
    out = jax.block_until_ready(out)

    ref = reference_forward(hidden_states, w_t, dense_b.reshape(1, -1),
                            input_tensor, gamma.reshape(1, -1),
                            beta.reshape(1, -1), layer_norm_eps)

    assert out.shape == (N, hidden_size)
    assert bool(jnp.all(jnp.isfinite(out))), "non-finite output"
    # bf16 matmul vs f32 reference -> moderate tolerance.
    assert jnp.allclose(out, ref, rtol=2e-2, atol=2e-2), "mismatch vs reference"

    print("KERNEL_OK")
</pallas_src>

<mosaic_0001>
module attributes {stable_mosaic.version = 11 : i64} {
  func.func @_luke_output_kernel_resident(%arg0: i32, %arg1: memref<8x512xbf16, #tpu.memory_space<vmem>>, %arg2: memref<512x128xbf16, #tpu.memory_space<vmem>>, %arg3: memref<1x128xf32, #tpu.memory_space<vmem>>, %arg4: memref<8x128xf32, #tpu.memory_space<vmem>>, %arg5: memref<1x128xf32, #tpu.memory_space<vmem>>, %arg6: memref<1x128xf32, #tpu.memory_space<vmem>>, %arg7: memref<8x128xf32, #tpu.memory_space<vmem>>) attributes {dimension_semantics = [#tpu.dimension_semantics<parallel>], iteration_bounds = array<i64: 2>, scalar_prefetch = 0 : i64, scratch_operands = 0 : i64, tpu.core_type = #tpu.core_type<tc>, window_params = [{transform_indices = @transform_0, window_bounds = array<i64: 8, 512>}, {pipeline_mode = #tpu.pipeline_mode<synchronous>, transform_indices = @transform_1, window_bounds = array<i64: 512, 128>}, {pipeline_mode = #tpu.pipeline_mode<synchronous>, transform_indices = @transform_2, window_bounds = array<i64: 1, 128>}, {transform_indices = @transform_3, window_bounds = array<i64: 8, 128>}, {pipeline_mode = #tpu.pipeline_mode<synchronous>, transform_indices = @transform_4, window_bounds = array<i64: 1, 128>}, {pipeline_mode = #tpu.pipeline_mode<synchronous>, transform_indices = @transform_5, window_bounds = array<i64: 1, 128>}, {transform_indices = @transform_6, window_bounds = array<i64: 8, 128>}]} {
    %c0 = arith.constant 0 : index
    %c0_0 = arith.constant 0 : index
    %0 = vector.load %arg1[%c0, %c0_0] : memref<8x512xbf16, #tpu.memory_space<vmem>>, vector<8x512xbf16>
    %c0_1 = arith.constant 0 : index
    %c0_2 = arith.constant 0 : index
    %1 = vector.load %arg2[%c0_1, %c0_2] : memref<512x128xbf16, #tpu.memory_space<vmem>>, vector<512x128xbf16>
    %cst = arith.constant dense<0.000000e+00> : vector<8x128xf32>
    %2 = tpu.matmul %0, %1, %cst {dimension_numbers = #tpu.dot_dimension_numbers<[1], [0], [0], [1], [0, 0, 1, 1], [], []>} : vector<8x512xbf16>, vector<512x128xbf16>, vector<8x128xf32> -> vector<8x128xf32>
    %c0_3 = arith.constant 0 : index
    %c0_4 = arith.constant 0 : index
    %3 = vector.load %arg3[%c0_3, %c0_4] : memref<1x128xf32, #tpu.memory_space<vmem>>, vector<1x128xf32>
    %4 = vector.broadcast %3 : vector<1x128xf32> to vector<8x128xf32>
    %5 = arith.addf %2, %4 : vector<8x128xf32>
    %c0_5 = arith.constant 0 : index
    %c0_6 = arith.constant 0 : index
    %6 = vector.load %arg4[%c0_5, %c0_6] : memref<8x128xf32, #tpu.memory_space<vmem>>, vector<8x128xf32>
    %7 = arith.addf %5, %6 : vector<8x128xf32>
    %cst_7 = arith.constant dense<0.000000e+00> : vector<8xf32>
    %8 = vector.multi_reduction <add>, %7, %cst_7 [1] : vector<8x128xf32> to vector<8xf32>
    %9 = vector.shape_cast %8 : vector<8xf32> to vector<8x1xf32>
    %cst_8 = arith.constant 1.280000e+02 : f32
    %10 = vector.broadcast %cst_8 : f32 to vector<8x1xf32>
    %11 = arith.divf %9, %10 : vector<8x1xf32>
    %12 = arith.mulf %7, %7 : vector<8x128xf32>
    %cst_9 = arith.constant dense<0.000000e+00> : vector<8xf32>
    %13 = vector.multi_reduction <add>, %12, %cst_9 [1] : vector<8x128xf32> to vector<8xf32>
    %14 = vector.shape_cast %13 : vector<8xf32> to vector<8x1xf32>
    %cst_10 = arith.constant 1.280000e+02 : f32
    %15 = vector.broadcast %cst_10 : f32 to vector<8x1xf32>
    %16 = arith.divf %14, %15 : vector<8x1xf32>
    %17 = arith.mulf %11, %11 : vector<8x1xf32>
    %18 = arith.subf %16, %17 : vector<8x1xf32>
    %cst_11 = arith.constant 0.000000e+00 : f32
    %19 = vector.broadcast %cst_11 : f32 to vector<8x1xf32>
    %20 = arith.maximumf %18, %19 : vector<8x1xf32>
    %21 = vector.broadcast %11 : vector<8x1xf32> to vector<8x128xf32>
    %22 = arith.subf %7, %21 : vector<8x128xf32>
    %cst_12 = arith.constant 9.99999996E-13 : f32
    %23 = vector.broadcast %cst_12 : f32 to vector<8x1xf32>
    %24 = arith.addf %20, %23 : vector<8x1xf32>
    %25 = math.rsqrt %24 : vector<8x1xf32>
    %26 = vector.broadcast %25 : vector<8x1xf32> to vector<8x128xf32>
    %27 = arith.mulf %22, %26 : vector<8x128xf32>
    %c0_13 = arith.constant 0 : index
    %c0_14 = arith.constant 0 : index
    %28 = vector.load %arg5[%c0_13, %c0_14] : memref<1x128xf32, #tpu.memory_space<vmem>>, vector<1x128xf32>
    %29 = vector.broadcast %28 : vector<1x128xf32> to vector<8x128xf32>
    %30 = arith.mulf %27, %29 : vector<8x128xf32>
    %c0_15 = arith.constant 0 : index
    %c0_16 = arith.constant 0 : index
    %31 = vector.load %arg6[%c0_15, %c0_16] : memref<1x128xf32, #tpu.memory_space<vmem>>, vector<1x128xf32>
    %32 = vector.broadcast %31 : vector<1x128xf32> to vector<8x128xf32>
    %33 = arith.addf %30, %32 : vector<8x128xf32>
    %c0_17 = arith.constant 0 : index
    %c0_18 = arith.constant 0 : index
    %34 = vector.load %arg7[%c0_17, %c0_18] : memref<8x128xf32, #tpu.memory_space<vmem>>, vector<8x128xf32>
    tpu.vector_store %arg7[%c0_17, %c0_18], %33 {strides = array<i32>} : memref<8x128xf32, #tpu.memory_space<vmem>>, vector<8x128xf32>,
    return
  }
  func.func @transform_0(%arg0: i32) -> (i32, i32) {
    %c0_i32 = arith.constant 0 : i32
    %c0_i32_0 = arith.constant 0 : i32
    return %arg0, %c0_i32 : i32, i32
  }
  func.func @transform_1(%arg0: i32) -> (i32, i32) {
    %c0_i32 = arith.constant 0 : i32
    %c0_i32_0 = arith.constant 0 : i32
    %c0_i32_1 = arith.constant 0 : i32
    return %c0_i32, %c0_i32_0 : i32, i32
  }
  func.func @transform_2(%arg0: i32) -> (i32, i32) {
    %c0_i32 = arith.constant 0 : i32
    %c0_i32_0 = arith.constant 0 : i32
    %c0_i32_1 = arith.constant 0 : i32
    return %c0_i32, %c0_i32_0 : i32, i32
  }
  func.func @transform_3(%arg0: i32) -> (i32, i32) {
    %c0_i32 = arith.constant 0 : i32
    %c0_i32_0 = arith.constant 0 : i32
    return %arg0, %c0_i32 : i32, i32
  }
  func.func @transform_4(%arg0: i32) -> (i32, i32) {
    %c0_i32 = arith.constant 0 : i32
    %c0_i32_0 = arith.constant 0 : i32
    %c0_i32_1 = arith.constant 0 : i32
    return %c0_i32, %c0_i32_0 : i32, i32
  }
  func.func @transform_5(%arg0: i32) -> (i32, i32) {
    %c0_i32 = arith.constant 0 : i32
    %c0_i32_0 = arith.constant 0 : i32
    %c0_i32_1 = arith.constant 0 : i32
    return %c0_i32, %c0_i32_0 : i32, i32
  }
  func.func @transform_6(%arg0: i32) -> (i32, i32) {
    %c0_i32 = arith.constant 0 : i32
    %c0_i32_0 = arith.constant 0 : i32
    return %arg0, %c0_i32 : i32, i32
  }
}

</mosaic_0001>

<llo_original>
// kernel: tpu_custom_call.1
$region0: #{tpu_custom_call.1}
  #allocation0 [shape = 'u32[]', space=smem, size = 0x4, offset = 0x4, fixed_abs, tag = 'smem constant byte address 0x4 - core index']
  #allocation1 [shape = 'u32[72,128]{1,0:T(1,128)}', space=vmem, size = 0x9000, scoped, tag = 'internal scratch']
  %s0 = inlined_call_operand.hbm [shape: bf16[16,512], index: 0, kind: input, shape index: {}]
  %s1 = inlined_call_operand.hbm [shape: bf16[512,128], index: 1, kind: input, shape index: {}]
  %s2 = inlined_call_operand.vmem [shape: f32[1,128], index: 2, kind: input, shape index: {}]
  %s3 = inlined_call_operand.hbm [shape: f32[16,128], index: 3, kind: input, shape index: {}]
  %s4 = inlined_call_operand.vmem [shape: f32[1,128], index: 4, kind: input, shape index: {}]
  %s5 = inlined_call_operand.vmem [shape: f32[1,128], index: 5, kind: input, shape index: {}]
  %s6 = inlined_call_operand.hbm [shape: f32[16,128], index: 6, kind: output, shape index: {}]
  %s7 = sld [smem:[#allocation0]]
  $region69: #{tpu_custom_call.1} parent=0
    _
  %s9 = ssub.s32 1, %s7
  %s10 = scalar_select 0, %s9, %s7
  $region1: #{tpu_custom_call.1} parent=0
    #allocation2 [shape = 'u8[16384]{0}', space=vmem, size = 0x4000, scoped, tag = 'input window, operand 0']
    #allocation3 [shape = 's32[2]{0}', space=sflag, size = 0x8, scoped, tag = 'scoped memory for tpu_custom_call.1']
    #allocation4 [shape = 's32[2]{0}', space=sflag, size = 0x8, scoped, tag = 'scoped memory for tpu_custom_call.1']
    #allocation5 [shape = 'u8[131072]{0}', space=vmem, size = 0x20000, scoped, tag = 'input window, operand 1, single buffered']
    #allocation6 [shape = 's32[1]{0}', space=sflag, size = 0x4, scoped, tag = 'scoped memory for tpu_custom_call.1']
    #allocation7 [shape = 'u8[8192]{0}', space=vmem, size = 0x2000, scoped, tag = 'input window, operand 3']
    #allocation8 [shape = 'u8[8192]{0}', space=vmem, size = 0x2000, scoped, tag = 'output window, operand 0']
    %11 = vsyncpa [#allocation3], 0
    %s12 = scalar_lea.sflag [#allocation3], 1
    %13 = vsyncpa %s12, 0
    %14 = vsyncpa [#allocation6], 0
    %15 = vsyncpa [#allocation4], 0
    %s16 = scalar_lea.sflag [#allocation4], 1
    %17 = vsyncpa %s16, 0
    loop: start=0, step=1, limit=4
    $region2: #{tpu_custom_call.1} parent=1 // loop_pre_header
      _
    $region3: #{tpu_custom_call.1} parent=1 // loop_header
      %s19 = sphi 0, %s23
      %p20 = scmp.ge.s32.totalorder %s19, 4
      %s29 = sphi 0, %s31
      %s32 = sphi 0, %s29
      %s33 = sphi 0, %s32
      %s49 = sphi 0, %s33
      %s53 = sphi 0, %s53
      %s55 = sphi 0, %s53
      %s56 = sphi 0, %s55
      %s70 = sphi 0, %s56
      %s74 = sphi 0, %s74
      %s76 = sphi 0, %s74
      %s77 = sphi 0, %s76
      %s91 = sphi 0, %s77
      %s97 = sphi 0, %s99
      %s100 = sphi 0, %s97
      %s101 = sphi 0, %s100
      %s117 = sphi 0, %s101
      %s121 = sphi 0, %s121
      %s123 = sphi 0, %s121
      %s124 = sphi 0, %s123
      %s138 = sphi 0, %s124
      %s142 = sphi 0, %s142
      %s144 = sphi 0, %s142
      %s145 = sphi 0, %s144
      %s159 = sphi 0, %s145
      %s165 = sphi 0, %s167
      %s168 = sphi 0, %s165
      %s169 = sphi 0, %s168
      %s185 = sphi 0, %s169
    $region4: #{tpu_custom_call.1} parent=1 // loop_header_branch
      %22 = sbr.rel (%p20) target = $region8
    $region5: #{tpu_custom_call.1} parent=1 // loop_body
      %s24 = ssub.s32 %s19, 1
      %s25 = ssub.s32 %s19, 2
      %s26 = sadd.s32 %s19, 1
      %s27 = ssub.s32 %s19, %s26
      %p28 = scmp.eq.s32.totalorder %s27, 0
      %s30 = sadd.s32 %s29, 1
      %s31 = scalar_select %p28, %s29, %s30
      %p34 = pneg %p28
      %p35 = scmp.eq.s32.totalorder %s19, 1
      %p36 = por %p34, %p35
      %p37 = scmp.ne.s32.totalorder %s29, %s32
      %p38 = scmp.eq.s32.totalorder %s19, 0
      %p39 = por %p37, %p38
      %p40 = scmp.ne.s32.totalorder %s29, %s32
      %p41 = scmp.eq.s32.totalorder %s24, 1
      %p42 = por %p40, %p41
      %p43 = scmp.ne.s32.totalorder %s32, %s33
      %p44 = scmp.eq.s32.totalorder %s24, 0
      %p45 = por %p43, %p44
      %p46 = scmp.ne.s32.totalorder %s32, %s33
      %p47 = scmp.eq.s32.totalorder %s25, 1
      %p48 = por %p46, %p47
      %p50 = scmp.ne.s32.totalorder %s33, %s49
      %p51 = scmp.eq.s32.totalorder %s25, 0
      %p52 = por %p50, %p51
      %s54 = sadd.s32 %s53, 1
      %p57 = scmp.eq.s32.totalorder %s19, 1
      %p58 = scmp.ne.s32.totalorder %s53, %s55
      %p59 = scmp.eq.s32.totalorder %s19, 0
      %p60 = por %p58, %p59
      %p61 = scmp.ne.s32.totalorder %s53, %s55
      %p62 = scmp.eq.s32.totalorder %s24, 1
      %p63 = por %p61, %p62
      %p64 = scmp.ne.s32.totalorder %s55, %s56
      %p65 = scmp.eq.s32.totalorder %s24, 0
      %p66 = por %p64, %p65
      %p67 = scmp.ne.s32.totalorder %s55, %s56
      %p68 = scmp.eq.s32.totalorder %s25, 1
      %p69 = por %p67, %p68
      %p71 = scmp.ne.s32.totalorder %s56, %s70
      %p72 = scmp.eq.s32.totalorder %s25, 0
      %p73 = por %p71, %p72
      %s75 = sadd.s32 %s74, 1
      %p78 = scmp.eq.s32.totalorder %s19, 1
      %p79 = scmp.ne.s32.totalorder %s74, %s76
      %p80 = scmp.eq.s32.totalorder %s19, 0
      %p81 = por %p79, %p80
      %p82 = scmp.ne.s32.totalorder %s74, %s76
      %p83 = scmp.eq.s32.totalorder %s24, 1
      %p84 = por %p82, %p83
      %p85 = scmp.ne.s32.totalorder %s76, %s77
      %p86 = scmp.eq.s32.totalorder %s24, 0
      %p87 = por %p85, %p86
      %p88 = scmp.ne.s32.totalorder %s76, %s77
      %p89 = scmp.eq.s32.totalorder %s25, 1
      %p90 = por %p88, %p89
      %p92 = scmp.ne.s32.totalorder %s77, %s91
      %p93 = scmp.eq.s32.totalorder %s25, 0
      %p94 = por %p92, %p93
      %s95 = ssub.s32 %s19, %s26
      %p96 = scmp.eq.s32.totalorder %s95, 0
      %s98 = sadd.s32 %s97, 1
      %s99 = scalar_select %p96, %s97, %s98
      %p102 = pneg %p96
      %p103 = scmp.eq.s32.totalorder %s19, 1
      %p104 = por %p102, %p103
      %p105 = scmp.ne.s32.totalorder %s97, %s100
      %p106 = scmp.eq.s32.totalorder %s19, 0
      %p107 = por %p105, %p106
      %p108 = scmp.ne.s32.totalorder %s97, %s100
      %p109 = scmp.eq.s32.totalorder %s24, 1
      %p110 = por %p108, %p109
      %p111 = scmp.ne.s32.totalorder %s100, %s101
      %p112 = scmp.eq.s32.totalorder %s24, 0
      %p113 = por %p111, %p112
      %p114 = scmp.ne.s32.totalorder %s100, %s101
      %p115 = scmp.eq.s32.totalorder %s25, 1
      %p116 = por %p114, %p115
      %p118 = scmp.ne.s32.totalorder %s101, %s117
      %p119 = scmp.eq.s32.totalorder %s25, 0
      %p120 = por %p118, %p119
      %s122 = sadd.s32 %s121, 1
      %p125 = scmp.eq.s32.totalorder %s19, 1
      %p126 = scmp.ne.s32.totalorder %s121, %s123
      %p127 = scmp.eq.s32.totalorder %s19, 0
      %p128 = por %p126, %p127
      %p129 = scmp.ne.s32.totalorder %s121, %s123
      %p130 = scmp.eq.s32.totalorder %s24, 1
      %p131 = por %p129, %p130
      %p132 = scmp.ne.s32.totalorder %s123, %s124
      %p133 = scmp.eq.s32.totalorder %s24, 0
      %p134 = por %p132, %p133
      %p135 = scmp.ne.s32.totalorder %s123, %s124
      %p136 = scmp.eq.s32.totalorder %s25, 1
      %p137 = por %p135, %p136
      %p139 = scmp.ne.s32.totalorder %s124, %s138
      %p140 = scmp.eq.s32.totalorder %s25, 0
      %p141 = por %p139, %p140
      %s143 = sadd.s32 %s142, 1
      %p146 = scmp.eq.s32.totalorder %s19, 1
      %p147 = scmp.ne.s32.totalorder %s142, %s144
      %p148 = scmp.eq.s32.totalorder %s19, 0
      %p149 = por %p147, %p148
      %p150 = scmp.ne.s32.totalorder %s142, %s144
      %p151 = scmp.eq.s32.totalorder %s24, 1
      %p152 = por %p150, %p151
      %p153 = scmp.ne.s32.totalorder %s144, %s145
      %p154 = scmp.eq.s32.totalorder %s24, 0
      %p155 = por %p153, %p154
      %p156 = scmp.ne.s32.totalorder %s144, %s145
      %p157 = scmp.eq.s32.totalorder %s25, 1
      %p158 = por %p156, %p157
      %p160 = scmp.ne.s32.totalorder %s145, %s159
      %p161 = scmp.eq.s32.totalorder %s25, 0
      %p162 = por %p160, %p161
      %s163 = ssub.s32 %s19, %s26
      %p164 = scmp.eq.s32.totalorder %s163, 0
      %s166 = sadd.s32 %s165, 1
      %s167 = scalar_select %p164, %s165, %s166
      %p170 = pneg %p164
      %p171 = scmp.eq.s32.totalorder %s19, 1
      %p172 = por %p170, %p171
      %p173 = scmp.ne.s32.totalorder %s165, %s168
      %p174 = scmp.eq.s32.totalorder %s19, 0
      %p175 = por %p173, %p174
      %p176 = scmp.ne.s32.totalorder %s165, %s168
      %p177 = scmp.eq.s32.totalorder %s24, 1
      %p178 = por %p176, %p177
      %p179 = scmp.ne.s32.totalorder %s168, %s169
      %p180 = scmp.eq.s32.totalorder %s24, 0
      %p181 = por %p179, %p180
      %p182 = scmp.ne.s32.totalorder %s168, %s169
      %p183 = scmp.eq.s32.totalorder %s25, 1
      %p184 = por %p182, %p183
      %p186 = scmp.ne.s32.totalorder %s169, %s185
      %p187 = scmp.eq.s32.totalorder %s25, 0
      %p188 = por %p186, %p187
      %p189 = scmp.le.s32.totalorder 1, %s19
      %p190 = scmp.lt.s32.totalorder %s19, 3
      %p191 = pnand %p189, %p190
      %p192 = pneg %p191
      // Predicated region
      $region9: #{tpu_custom_call.1} parent=5 // pred_check
        _
      $region10: #{tpu_custom_call.1} parent=5 // pred_check_branch
        %194 = sbr.rel (%p191) target = $region12
      $region11: #{tpu_custom_call.1} parent=5 // pred_region
        %s195 = ssub.s32 %s19, 1
        // Predicated region
        $region13: #{tpu_custom_call.1} parent=11 // pred_check
          %p196 = pneg %p66
        $region14: #{tpu_custom_call.1} parent=11 // pred_check_branch
          %198 = sbr.rel (%p196) target = $region16
        $region15: #{tpu_custom_call.1} parent=11 // pred_region
          %200 = vsyncadd [#allocation6], 0
          %s201 = sshll.u32 %s1, 4
          %s202 = int_to_ptr.hbm [resolvable:$true] %s201
          %s203 = sshll.u32 [#allocation5], 4
          %s204 = int_to_ptr.vmem [resolvable:$true] %s203
          %209 = dma.hbm_to_vmem [thread:$0]  %s202, 4096, %s204, [#allocation6], 64, 64, 4
        $region16: #{tpu_custom_call.1} parent=11 // pred_fallthru
          _
        // Predicated region
        $region17: #{tpu_custom_call.1} parent=11 // pred_check
          %p210 = pneg %p87
        $region18: #{tpu_custom_call.1} parent=11 // pred_check_branch
          %212 = sbr.rel (%p210) target = $region20
        $region19: #{tpu_custom_call.1} parent=11 // pred_region
          _
        $region20: #{tpu_custom_call.1} parent=11 // pred_fallthru
          _
        // Predicated region
        $region21: #{tpu_custom_call.1} parent=11 // pred_check
          %p213 = pneg %p134
        $region22: #{tpu_custom_call.1} parent=11 // pred_check_branch
          %215 = sbr.rel (%p213) target = $region24
        $region23: #{tpu_custom_call.1} parent=11 // pred_region
          _
        $region24: #{tpu_custom_call.1} parent=11 // pred_fallthru
          _
        // Predicated region
        $region25: #{tpu_custom_call.1} parent=11 // pred_check
          %p216 = pneg %p155
        $region26: #{tpu_custom_call.1} parent=11 // pred_check_branch
          %218 = sbr.rel (%p216) target = $region28
        $region27: #{tpu_custom_call.1} parent=11 // pred_region
          _
        $region28: #{tpu_custom_call.1} parent=11 // pred_fallthru
          _
      $region12: #{tpu_custom_call.1} parent=5 // pred_fallthru
        _
      %p219 = scmp.lt.s32.totalorder %s19, 2
      // Predicated region
      $region29: #{tpu_custom_call.1} parent=5 // pred_check
        %p220 = pneg %p219
      $region30: #{tpu_custom_call.1} parent=5 // pred_check_branch
        %222 = sbr.rel (%p220) target = $region32
      $region31: #{tpu_custom_call.1} parent=5 // pred_region
        // Predicated region
        $region33: #{tpu_custom_call.1} parent=31 // pred_check
          %p223 = pneg %p39
        $region34: #{tpu_custom_call.1} parent=31 // pred_check_branch
          %225 = sbr.rel (%p223) target = $region36
        $region35: #{tpu_custom_call.1} parent=31 // pred_region
          %s226 = sand.u32 %s19, 1
          %s227 = scalar_lea.sflag [#allocation3], %s226
          %s228 = sand.u32 %s29, 1
          %s229 = smul.addr %s228, 16
          %s230 = scalar_lea.vmem [#allocation2], %s229
          %232 = vsyncadd %s227, 0
          %s233 = smul.addr %s19, 4
          %s234 = smul.addr %s233, 4
          %s235 = scalar_lea.hbm %s0, %s234
          %s237 = sshll.u32 %s235, 4
          %s238 = int_to_ptr.hbm [resolvable:$true] %s237
          %s239 = sshll.u32 %s230, 4
          %s240 = int_to_ptr.vmem [resolvable:$true] %s239
          %242 = dma.hbm_to_vmem [thread:$0]  %s238, 256, %s240, %s227
        $region36: #{tpu_custom_call.1} parent=31 // pred_fallthru
          _
        // Predicated region
        $region37: #{tpu_custom_call.1} parent=31 // pred_check
          %p243 = pneg %p107
        $region38: #{tpu_custom_call.1} parent=31 // pred_check_branch
          %245 = sbr.rel (%p243) target = $region40
        $region39: #{tpu_custom_call.1} parent=31 // pred_region
          %s246 = sand.u32 %s19, 1
          %s247 = scalar_lea.sflag [#allocation3], %s246
          %s248 = sand.u32 %s97, 1
          %s249 = smul.addr %s248, 8
          %s250 = scalar_lea.vmem [#allocation7], %s249
          %252 = vsyncadd %s247, 0
          %s253 = smul.addr %s19, 8
          %s254 = scalar_lea.hbm %s3, %s253
          %s256 = sshll.u32 %s254, 4
          %s257 = int_to_ptr.hbm [resolvable:$true] %s256
          %s258 = sshll.u32 %s250, 4
          %s259 = int_to_ptr.vmem [resolvable:$true] %s258
          %261 = dma.hbm_to_vmem [thread:$0]  %s257, 128, %s259, %s247
        $region40: #{tpu_custom_call.1} parent=31 // pred_fallthru
          _
      $region32: #{tpu_custom_call.1} parent=5 // pred_fallthru
        _
      %p262 = scmp.le.s32.totalorder 1, %s19
      %p263 = scmp.lt.s32.totalorder %s19, 3
      %p264 = pnand %p262, %p263
      %p265 = pneg %p264
      // Predicated region
      $region41: #{tpu_custom_call.1} parent=5 // pred_check
        _
      $region42: #{tpu_custom_call.1} parent=5 // pred_check_branch
        %267 = sbr.rel (%p264) target = $region44
      $region43: #{tpu_custom_call.1} parent=5 // pred_region
        %s268 = ssub.s32 %s19, 1
        %s269 = sand.u32 %s24, 1
        %s270 = scalar_lea.sflag [#allocation3], %s269
        %s271 = sand.u32 %s32, 1
        %s272 = smul.addr %s271, 16
        %s273 = scalar_lea.vmem [#allocation2], %s272
        // Predicated region
        $region45: #{tpu_custom_call.1} parent=43 // pred_check
          %p274 = pneg %p45
        $region46: #{tpu_custom_call.1} parent=43 // pred_check_branch
          %276 = sbr.rel (%p274) target = $region48
        $region47: #{tpu_custom_call.1} parent=43 // pred_region
          %278 = dma.done %s270, 256
        $region48: #{tpu_custom_call.1} parent=43 // pred_fallthru
          _
        // Predicated region
        $region49: #{tpu_custom_call.1} parent=43 // pred_check
          %p279 = pneg %p66
        $region50: #{tpu_custom_call.1} parent=43 // pred_check_branch
          %281 = sbr.rel (%p279) target = $region52
        $region51: #{tpu_custom_call.1} parent=43 // pred_region
          %283 = dma.done [#allocation6], 4096
        $region52: #{tpu_custom_call.1} parent=43 // pred_fallthru
          _
        %s284 = sand.u32 %s24, 1
        %s285 = scalar_lea.sflag [#allocation3], %s284
        %s286 = sand.u32 %s100, 1
        %s287 = smul.addr %s286, 8
        %s288 = scalar_lea.vmem [#allocation7], %s287
        // Predicated region
        $region53: #{tpu_custom_call.1} parent=43 // pred_check
          %p289 = pneg %p113
        $region54: #{tpu_custom_call.1} parent=43 // pred_check_branch
          %291 = sbr.rel (%p289) target = $region56
        $region55: #{tpu_custom_call.1} parent=43 // pred_region
          %293 = dma.done %s285, 128
        $region56: #{tpu_custom_call.1} parent=43 // pred_fallthru
          _
        %s294 = sand.u32 %s24, 1
        %s295 = scalar_lea.sflag [#allocation3], %s294
        %s296 = sand.u32 %s32, 1
        %s297 = smul.addr %s296, 16
        %s298 = scalar_lea.vmem [#allocation2], %s297
        %p299 = pneg %p45
        %p300 = pneg %p42
        %p301 = pneg %p66
        %p302 = pneg %p63
        %p303 = pneg %p87
        %p304 = pneg %p84
        %s305 = sand.u32 %s24, 1
        %s306 = scalar_lea.sflag [#allocation3], %s305
        %s307 = sand.u32 %s100, 1
        %s308 = smul.addr %s307, 8
        %s309 = scalar_lea.vmem [#allocation7], %s308
        %p310 = pneg %p113
        %p311 = pneg %p110
        %p312 = pneg %p134
        %p313 = pneg %p131
        %p314 = pneg %p155
        %p315 = pneg %p152
        %p316 = pneg %p181
        %p317 = pneg %p178
        %s318 = sand.u32 %s168, 1
        %s319 = scalar_lea.sflag [#allocation4], %s318
        %s320 = sand.u32 %s168, 1
        %s321 = smul.addr %s320, 8
        %s322 = scalar_lea.vmem [#allocation8], %s321
        %v323 = vld [vmem:[%s273] sm:$0xff]
        %v324 = vld [vmem:[%s273 + $0x8] sm:$0xff]
        %v325 = vld [vmem:[#allocation5] sm:$0xf]
        %v326 = vld [vmem:[#allocation5 + $0x4] sm:$0xf]
        %v327 = vld [vmem:[#allocation5 + $0x8] sm:$0xf]
        %v328 = vld [vmem:[#allocation5 + $0xc] sm:$0xf]
        %v329 = vld [vmem:[#allocation5 + $0x10] sm:$0xf]
        %v330 = vld [vmem:[#allocation5 + $0x14] sm:$0xf]
        %v331 = vld [vmem:[#allocation5 + $0x18] sm:$0xf]
        %v332 = vld [vmem:[#allocation5 + $0x1c] sm:$0xf]
        %v333 = vld [vmem:[#allocation5 + $0x20] sm:$0xf]
        %v334 = vld [vmem:[#allocation5 + $0x24] sm:$0xf]
        %v335 = vld [vmem:[#allocation5 + $0x28] sm:$0xf]
        %v336 = vld [vmem:[#allocation5 + $0x2c] sm:$0xf]
        %v337 = vld [vmem:[#allocation5 + $0x30] sm:$0xf]
        %v338 = vld [vmem:[#allocation5 + $0x34] sm:$0xf]
        %v339 = vld [vmem:[#allocation5 + $0x38] sm:$0xf]
        %v340 = vld [vmem:[#allocation5 + $0x3c] sm:$0xf]
        %v341 = vld [vmem:[#allocation5 + $0x40] sm:$0xf]
        %v342 = vld [vmem:[#allocation5 + $0x44] sm:$0xf]
        %v343 = vld [vmem:[#allocation5 + $0x48] sm:$0xf]
        %v344 = vld [vmem:[#allocation5 + $0x4c] sm:$0xf]
        %v345 = vld [vmem:[#allocation5 + $0x50] sm:$0xf]
        %v346 = vld [vmem:[#allocation5 + $0x54] sm:$0xf]
        %v347 = vld [vmem:[#allocation5 + $0x58] sm:$0xf]
        %v348 = vld [vmem:[#allocation5 + $0x5c] sm:$0xf]
        %v349 = vld [vmem:[#allocation5 + $0x60] sm:$0xf]
        %v350 = vld [vmem:[#allocation5 + $0x64] sm:$0xf]
        %v351 = vld [vmem:[#allocation5 + $0x68] sm:$0xf]
        %v352 = vld [vmem:[#allocation5 + $0x6c] sm:$0xf]
        %v353 = vld [vmem:[#allocation5 + $0x70] sm:$0xf]
        %v354 = vld [vmem:[#allocation5 + $0x74] sm:$0xf]
        %v355 = vld [vmem:[#allocation5 + $0x78] sm:$0xf]
        %v356 = vld [vmem:[#allocation5 + $0x7c] sm:$0xf]
        %v357 = vld [vmem:[#allocation5 + $0x80] sm:$0xf]
        %v358 = vld [vmem:[#allocation5 + $0x84] sm:$0xf]
        %v359 = vld [vmem:[#allocation5 + $0x88] sm:$0xf]
        %v360 = vld [vmem:[#allocation5 + $0x8c] sm:$0xf]
        %v361 = vld [vmem:[#allocation5 + $0x90] sm:$0xf]
        %v362 = vld [vmem:[#allocation5 + $0x94] sm:$0xf]
        %v363 = vld [vmem:[#allocation5 + $0x98] sm:$0xf]
        %v364 = vld [vmem:[#allocation5 + $0x9c] sm:$0xf]
        %v365 = vld [vmem:[#allocation5 + $0xa0] sm:$0xf]
        %v366 = vld [vmem:[#allocation5 + $0xa4] sm:$0xf]
        %v367 = vld [vmem:[#allocation5 + $0xa8] sm:$0xf]
        %v368 = vld [vmem:[#allocation5 + $0xac] sm:$0xf]
        %v369 = vld [vmem:[#allocation5 + $0xb0] sm:$0xf]
        %v370 = vld [vmem:[#allocation5 + $0xb4] sm:$0xf]
        %v371 = vld [vmem:[#allocation5 + $0xb8] sm:$0xf]
        %v372 = vld [vmem:[#allocation5 + $0xbc] sm:$0xf]
        %v373 = vld [vmem:[#allocation5 + $0xc0] sm:$0xf]
        %v374 = vld [vmem:[#allocation5 + $0xc4] sm:$0xf]
        %v375 = vld [vmem:[#allocation5 + $0xc8] sm:$0xf]
        %v376 = vld [vmem:[#allocation5 + $0xcc] sm:$0xf]
        %v377 = vld [vmem:[#allocation5 + $0xd0] sm:$0xf]
        %v378 = vld [vmem:[#allocation5 + $0xd4] sm:$0xf]
        %v379 = vld [vmem:[#allocation5 + $0xd8] sm:$0xf]
        %v380 = vld [vmem:[#allocation5 + $0xdc] sm:$0xf]
        %v381 = vld [vmem:[#allocation5 + $0xe0] sm:$0xf]
        %v382 = vld [vmem:[#allocation5 + $0xe4] sm:$0xf]
        %v383 = vld [vmem:[#allocation5 + $0xe8] sm:$0xf]
        %v384 = vld [vmem:[#allocation5 + $0xec] sm:$0xf]
        %v385 = vld [vmem:[#allocation5 + $0xf0] sm:$0xf]
        %v386 = vld [vmem:[#allocation5 + $0xf4] sm:$0xf]
        %v387 = vld [vmem:[#allocation5 + $0xf8] sm:$0xf]
        %v388 = vld [vmem:[#allocation5 + $0xfc] sm:$0xf]
        %v389 = vld [vmem:[%s2] sm:$0x1]
        %v391 = vperm.slane %v389, 0
        %v395 = vunpack.c.l.b16 %v323
        %v396 = vunpack.c.h.b16 %v323
        %v397 = vunpack.c.l.b16 %v324
        %v398 = vunpack.c.h.b16 %v324
        %v399 = vpack.c.b16 %v395, %v395
        %v400 = vpack.c.b16 %v396, %v396
        %v401 = vpack.c.b16 %v397, %v397
        %v402 = vpack.c.b16 %v398, %v398
        %v471 = vunpack.c.l.b16 %v325
        %v472 = vunpack.c.l.b16 %v326
        %v473 = vunpack.c.l.b16 %v327
        %v474 = vunpack.c.l.b16 %v328
        %v475 = vunpack.c.l.b16 %v329
        %v476 = vunpack.c.l.b16 %v330
        %v477 = vunpack.c.l.b16 %v331
        %v478 = vunpack.c.l.b16 %v332
        %v479 = vunpack.c.l.b16 %v333
        %v480 = vunpack.c.l.b16 %v334
        %v481 = vunpack.c.l.b16 %v335
        %v482 = vunpack.c.l.b16 %v336
        %v483 = vunpack.c.l.b16 %v337
        %v484 = vunpack.c.l.b16 %v338
        %v485 = vunpack.c.l.b16 %v339
        %v486 = vunpack.c.l.b16 %v340
        %v487 = vunpack.c.l.b16 %v341
        %v488 = vunpack.c.l.b16 %v342
        %v489 = vunpack.c.l.b16 %v343
        %v490 = vunpack.c.l.b16 %v344
        %v491 = vunpack.c.l.b16 %v345
        %v492 = vunpack.c.l.b16 %v346
        %v493 = vunpack.c.l.b16 %v347
        %v494 = vunpack.c.l.b16 %v348
        %v495 = vunpack.c.l.b16 %v349
        %v496 = vunpack.c.l.b16 %v350
        %v497 = vunpack.c.l.b16 %v351
        %v498 = vunpack.c.l.b16 %v352
        %v499 = vunpack.c.l.b16 %v353
        %v500 = vunpack.c.l.b16 %v354
        %v501 = vunpack.c.l.b16 %v355
        %v502 = vunpack.c.l.b16 %v356
        %v503 = vunpack.c.l.b16 %v357
        %v504 = vunpack.c.l.b16 %v358
        %v505 = vunpack.c.l.b16 %v359
        %v506 = vunpack.c.l.b16 %v360
        %v507 = vunpack.c.l.b16 %v361
        %v508 = vunpack.c.l.b16 %v362
        %v509 = vunpack.c.l.b16 %v363
        %v510 = vunpack.c.l.b16 %v364
        %v511 = vunpack.c.l.b16 %v365
        %v512 = vunpack.c.l.b16 %v366
        %v513 = vunpack.c.l.b16 %v367
        %v514 = vunpack.c.l.b16 %v368
        %v515 = vunpack.c.l.b16 %v369
        %v516 = vunpack.c.l.b16 %v370
        %v517 = vunpack.c.l.b16 %v371
        %v518 = vunpack.c.l.b16 %v372
        %v519 = vunpack.c.l.b16 %v373
        %v520 = vunpack.c.l.b16 %v374
        %v521 = vunpack.c.l.b16 %v375
        %v522 = vunpack.c.l.b16 %v376
        %v523 = vunpack.c.l.b16 %v377
        %v524 = vunpack.c.l.b16 %v378
        %v525 = vunpack.c.l.b16 %v379
        %v526 = vunpack.c.l.b16 %v380
        %v527 = vunpack.c.l.b16 %v381
        %v528 = vunpack.c.l.b16 %v382
        %v529 = vunpack.c.l.b16 %v383
        %v530 = vunpack.c.l.b16 %v384
        %v531 = vunpack.c.l.b16 %v385
        %v532 = vunpack.c.l.b16 %v386
        %v533 = vunpack.c.l.b16 %v387
        %v534 = vunpack.c.l.b16 %v388
        %v535 = vpack.c.b16 %v472, %v471
        %v536 = vpack.c.b16 %v474, %v473
        %v537 = vpack.c.b16 %v476, %v475
        %v538 = vpack.c.b16 %v478, %v477
        %v539 = vpack.c.b16 %v480, %v479
        %v540 = vpack.c.b16 %v482, %v481
        %v541 = vpack.c.b16 %v484, %v483
        %v542 = vpack.c.b16 %v486, %v485
        %v543 = vpack.c.b16 %v488, %v487
        %v544 = vpack.c.b16 %v490, %v489
        %v545 = vpack.c.b16 %v492, %v491
        %v546 = vpack.c.b16 %v494, %v493
        %v547 = vpack.c.b16 %v496, %v495
        %v548 = vpack.c.b16 %v498, %v497
        %v549 = vpack.c.b16 %v500, %v499
        %v550 = vpack.c.b16 %v502, %v501
        %v551 = vpack.c.b16 %v504, %v503
        %v552 = vpack.c.b16 %v506, %v505
        %v553 = vpack.c.b16 %v508, %v507
        %v554 = vpack.c.b16 %v510, %v509
        %v555 = vpack.c.b16 %v512, %v511
        %v556 = vpack.c.b16 %v514, %v513
        %v557 = vpack.c.b16 %v516, %v515
        %v558 = vpack.c.b16 %v518, %v517
        %v559 = vpack.c.b16 %v520, %v519
        %v560 = vpack.c.b16 %v522, %v521
        %v561 = vpack.c.b16 %v524, %v523
        %v562 = vpack.c.b16 %v526, %v525
        %v563 = vpack.c.b16 %v528, %v527
        %v564 = vpack.c.b16 %v530, %v529
        %v565 = vpack.c.b16 %v532, %v531
        %v566 = vpack.c.b16 %v534, %v533
        %599 = vmatpush.bf16.msra.mxu0 %v542
        %600 = vmatpush.bf16.msra.mxu0 %v541
        %601 = vmatpush.bf16.msra.mxu0 %v540
        %602 = vmatpush.bf16.msra.mxu0 %v539
        %603 = vmatpush.bf16.msra.mxu0 %v538
        %604 = vmatpush.bf16.msra.mxu0 %v537
        %605 = vmatpush.bf16.msra.mxu0 %v536
        %606 = vmatpush.bf16.msra.mxu0 %v535
        %607 = vmatmul.bf16.gmra.mxu0 %v399
        %v608 = vpop.f32.mrf.mxu0
        %v609 = vadd.f32 %v391, %v608
        %v610 = vpop.f32.mrf.mxu0
        %611 = vdwg.mxu0
        %612 = vmatpush.bf16.msra.mxu0 %v550
        %613 = vmatpush.bf16.msra.mxu0 %v549
        %614 = vmatpush.bf16.msra.mxu0 %v548
        %615 = vmatpush.bf16.msra.mxu0 %v547
        %616 = vmatpush.bf16.msra.mxu0 %v546
        %617 = vmatpush.bf16.msra.mxu0 %v545
        %618 = vmatpush.bf16.msra.mxu0 %v544
        %619 = vmatpush.bf16.msra.mxu0 %v543
        %620 = vmatmul.bf16.gmra.mxu0 %v400
        %v621 = vpop.f32.mrf.mxu0
        %v622 = vadd.f32 %v609, %v621
        %v623 = vpop.f32.mrf.mxu0
        %624 = vdwg.mxu0
        %625 = vmatpush.bf16.msra.mxu0 %v558
        %626 = vmatpush.bf16.msra.mxu0 %v557
        %627 = vmatpush.bf16.msra.mxu0 %v556
        %628 = vmatpush.bf16.msra.mxu0 %v555
        %629 = vmatpush.bf16.msra.mxu0 %v554
        %630 = vmatpush.bf16.msra.mxu0 %v553
        %631 = vmatpush.bf16.msra.mxu0 %v552
        %632 = vmatpush.bf16.msra.mxu0 %v551
        %633 = vmatmul.bf16.gmra.mxu0 %v401
        %v634 = vpop.f32.mrf.mxu0
        %v635 = vadd.f32 %v622, %v634
        %v636 = vpop.f32.mrf.mxu0
        %637 = vdwg.mxu0
        %638 = vmatpush.bf16.msra.mxu0 %v566
        %639 = vmatpush.bf16.msra.mxu0 %v565
        %640 = vmatpush.bf16.msra.mxu0 %v564
        %641 = vmatpush.bf16.msra.mxu0 %v563
        %642 = vmatpush.bf16.msra.mxu0 %v562
        %643 = vmatpush.bf16.msra.mxu0 %v561
        %644 = vmatpush.bf16.msra.mxu0 %v560
        %645 = vmatpush.bf16.msra.mxu0 %v559
        %646 = vmatmul.bf16.gmra.mxu0 %v402
        %v647 = vpop.f32.mrf.mxu0
        %v648 = vadd.f32 %v635, %v647
        %v649 = vpop.f32.mrf.mxu0
        %650 = vdwg.mxu0
        %v651 = vld [vmem:[%s288] sm:$0xff]
        %v652 = vadd.f32 %v648, %v651
        %653 = vadd.xlane.f32.xlu0 %v652
        %v654 = vpop.xlane.xlu0 %653
        %v655 = vrcp.pop 128.0
        %v656 = vmul.f32 128.0, %v655
        %v657 = vsub.f32 1.0, %v656
        %v658 = vmul.f32 %v655, %v657
        %v659 = vadd.f32 %v655, %v658
        %vm660 = vweird.f32 %v655
        %v661 = vsel %vm660, %v655, %v659
        %v662 = vmul.f32 %v654, %v661
        %v663 = vmul.f32 %v652, %v652
        %664 = vadd.xlane.f32.xlu0 %v663
        %v665 = vpop.xlane.xlu0 %664
        %v666 = vmul.f32 %v665, %v661
        %v667 = vmul.f32 %v662, %v662
        %v668 = vsub.f32 %v666, %v667
        %v669 = vmax.f32 %v668, 0.0
        %v670 = vsub.f32 %v652, %v662
        %v671 = vadd.f32 %v669, 1e-12
        %v672 = vrsqrt.pop %v671
        %v673 = vmul.f32 %v672, %v671
        %v674 = vmul.f32 %v673, %v672
        %v675 = vmul.f32 0.5, %v674
        %v676 = vsub.f32 1.5, %v675
        %v677 = vmul.f32 %v672, %v676
        %vm678 = vweird.f32 %v671
        %vm679 = vweird.f32 %v672
        %vm680 = vmor %vm678, %vm679
        %v681 = vsel %vm680, %v672, %v677
        %v682 = vmul.f32 %v670, %v681
        %v683 = vld [vmem:[%s4] sm:$0x1]
        %v685 = vperm.slane %v683, 0
        %v687 = vmul.f32 %v682, %v685
        %v688 = vld [vmem:[%s5] sm:$0x1]
        %v690 = vperm.slane %v688, 0
        %v692 = vadd.f32 %v687, %v690
        %693 = vst [vmem:[%s322] sm:$0xff] %v692
        %s694 = sand.u32 %s168, 1
        %s695 = scalar_lea.sflag [#allocation4], %s694
        %s696 = sand.u32 %s168, 1
        %s697 = smul.addr %s696, 8
        %s698 = scalar_lea.vmem [#allocation8], %s697
        // Predicated region
        $region57: #{tpu_custom_call.1} parent=43 // pred_check
          %p699 = pneg %p178
        $region58: #{tpu_custom_call.1} parent=43 // pred_check_branch
          %701 = sbr.rel (%p699) target = $region60
        $region59: #{tpu_custom_call.1} parent=43 // pred_region
          %703 = vsyncadd %s695, 0
          %s704 = smul.addr %s24, 8
          %s705 = scalar_lea.hbm %s6, %s704
          %s707 = sshll.u32 %s698, 4
          %s708 = int_to_ptr.vmem [resolvable:$true] %s707
          %s709 = sshll.u32 %s705, 4
          %s710 = int_to_ptr.hbm [resolvable:$true] %s709
          %712 = dma.vmem_to_hbm [thread:$0]  %s708, 128, %s710, %s695
        $region60: #{tpu_custom_call.1} parent=43 // pred_fallthru
          _
      $region44: #{tpu_custom_call.1} parent=5 // pred_fallthru
        _
      %p713 = scmp.le.s32.totalorder 2, %s19
      // Predicated region
      $region61: #{tpu_custom_call.1} parent=5 // pred_check
        %p714 = pneg %p713
      $region62: #{tpu_custom_call.1} parent=5 // pred_check_branch
        %716 = sbr.rel (%p714) target = $region64
      $region63: #{tpu_custom_call.1} parent=5 // pred_region
        %s717 = ssub.s32 %s19, 2
        // Predicated region
        $region65: #{tpu_custom_call.1} parent=63 // pred_check
          %p718 = pneg %p184
        $region66: #{tpu_custom_call.1} parent=63 // pred_check_branch
          %720 = sbr.rel (%p718) target = $region68
        $region67: #{tpu_custom_call.1} parent=63 // pred_region
          %s721 = sand.u32 %s169, 1
          %s722 = scalar_lea.sflag [#allocation4], %s721
          %s723 = sand.u32 %s169, 1
          %s724 = smul.addr %s723, 8
          %s725 = scalar_lea.vmem [#allocation8], %s724
          %727 = dma.done %s722, 128
        $region68: #{tpu_custom_call.1} parent=63 // pred_fallthru
          _
      $region64: #{tpu_custom_call.1} parent=5 // pred_fallthru
        _
    $region6: #{tpu_custom_call.1} parent=1 // loop_footer
      %s23 = sadd.s32 1, %s19
    $region7: #{tpu_custom_call.1} parent=1 // loop_footer_branch
      %18 = sbr.rel target = $region3
    $region8: #{tpu_custom_call.1} parent=1 // loop_exit
      _
    %728 = vsyncpa [#allocation3], 1
    %s729 = scalar_lea.sflag [#allocation3], 1
    %730 = vsyncpa %s729, 1
    %731 = vsyncpa [#allocation6], 1
    %732 = vsyncpa [#allocation4], 1
    %s733 = scalar_lea.sflag [#allocation4], 1
    %734 = vsyncpa %s733, 1

</llo_original>
